<compile_context>
chip_gen: v7x
topology: tpu7x:2x2x1
jax: 0.10.0
libtpu: 0.0.40
codegen_flags: <defaults>
</compile_context>

<pallas_src>
import math
from functools import partial

import jax
import jax.numpy as jnp
from jax.experimental import pallas as pl
from jax.experimental.pallas import tpu as pltpu


_NCORES = 2                          # leading "parallel" grid axis
_ROW_TILE_BYTES = 2 * 1024 * 1024    # ~2 MiB per input per pipeline buffer
_VMEM_LIMIT_BYTES = 48 * 1024 * 1024  # below physical VMEM on v5e/v6e/v7x


def _edge_sum_kernel(x1_ref, x2_ref, o1_ref, o2_ref, *, W, n_valid):
    """Accumulates vertical |diff| partials for one (B, H*W) block of rows.

    x1_ref / x2_ref : (B, H*W) block of flattened images (native dtype).
    o1_ref / o2_ref : (8, n_valid) f32 partial-sum blocks, resident across the
                      inner ("arbitrary") grid axis -> accumulator.
    """
    i = pl.program_id(1)

    @pl.when(i == 0)
    def _init():
        o1_ref[...] = jnp.zeros_like(o1_ref)
        o2_ref[...] = jnp.zeros_like(o2_ref)

    B = x1_ref.shape[0]  # static, multiple of 8 by construction

    x1 = x1_ref[...].astype(jnp.float32)
    x2 = x2_ref[...].astype(jnp.float32)

    # Vertical neighbour in the flat (H*W) layout is +W lanes away.
    d1 = jnp.abs(x1[:, :n_valid] - x1[:, W:])   # (B, n_valid)
    d2 = jnp.abs(x2[:, :n_valid] - x2[:, W:])

    # Fold B rows into an 8-sublane slab: pure vreg adds, no cross-lane reduce.
    o1_ref[...] += jnp.sum(d1.reshape(B // 8, 8, n_valid), axis=0)
    o2_ref[...] += jnp.sum(d2.reshape(B // 8, 8, n_valid), axis=0)


def edge_sums(x1, x2):
    """Returns (sum |X1_up - X1_down|, sum |X2_up - X2_down|) as f32 scalars."""
    assert x1.shape == x2.shape and x1.ndim == 4
    N, C, H, W = x1.shape
    assert H >= 2, "need at least two rows for a vertical edge"
    nc, HW = N * C, H * W
    n_valid = (H - 1) * W

    x1f = x1.reshape(nc, HW)
    x2f = x2.reshape(nc, HW)

    # Pick rows-per-block B (multiple of 8) targeting ~2 MiB per input tile,
    # but no larger than one core's share of the batch.
    itemsize = jnp.dtype(x1.dtype).itemsize
    rows_budget = max(1, _ROW_TILE_BYTES // (HW * itemsize))
    B = max(8, (rows_budget // 8) * 8)
    rows_per_core = pl.cdiv(nc, _NCORES)
    B = min(B, max(8, pl.cdiv(rows_per_core, 8) * 8))

    G = pl.cdiv(rows_per_core, B)        # inner ("arbitrary") grid extent
    total_rows = _NCORES * G * B
    if total_rows != nc:                 # zero rows add exactly 0 to the sums
        pad = total_rows - nc
        x1f = jnp.pad(x1f, ((0, pad), (0, 0)))
        x2f = jnp.pad(x2f, ((0, pad), (0, 0)))

    kernel = partial(_edge_sum_kernel, W=W, n_valid=n_valid)

    o1, o2 = pl.pallas_call(
        kernel,
        out_shape=(
            jax.ShapeDtypeStruct((_NCORES * 8, n_valid), jnp.float32),
            jax.ShapeDtypeStruct((_NCORES * 8, n_valid), jnp.float32),
        ),
        grid=(_NCORES, G),
        in_specs=[
            pl.BlockSpec((B, HW), lambda c, i: (c * G + i, 0)),
            pl.BlockSpec((B, HW), lambda c, i: (c * G + i, 0)),
        ],
        out_specs=(
            pl.BlockSpec((8, n_valid), lambda c, i: (c, 0)),
            pl.BlockSpec((8, n_valid), lambda c, i: (c, 0)),
        ),
        compiler_params=pltpu.CompilerParams(
            dimension_semantics=("parallel", "arbitrary"),
            vmem_limit_bytes=_VMEM_LIMIT_BYTES,
        ),
    )(x1f, x2f)

    # Tiny final reduction (once per call) over the per-core vreg partials.
    return jnp.sum(o1), jnp.sum(o2)


def edgeV_loss(x1, x2):
    """Exact reproduction of the PyTorch module's forward pass."""
    s1, s2 = edge_sums(x1, x2)
    s1 = float(jax.block_until_ready(s1))
    s2 = float(jax.block_until_ready(s2))
    # PyTorch: -np.log(int(sum1) / int(sum2)); int() truncates toward zero.
    return -math.log(int(s1) / int(s2))


if __name__ == "__main__":
    key = jax.random.PRNGKey(0)
    k1, k2 = jax.random.split(key)
    N, C, H, W = 2, 4, 16, 16
    X1 = jax.random.normal(k1, (N, C, H, W), dtype=jnp.float32) * 3.0 + 1.0
    X2 = jax.random.normal(k2, (N, C, H, W), dtype=jnp.float32) * 2.0 + 0.5

    # Kernel sums vs pure-JAX reference.
    s1, s2 = jax.block_until_ready(edge_sums(X1, X2))
    ref_s1 = jnp.sum(jnp.abs(X1[:, :, :-1, :] - X1[:, :, 1:, :]))
    ref_s2 = jnp.sum(jnp.abs(X2[:, :, :-1, :] - X2[:, :, 1:, :]))
    assert jnp.allclose(s1, ref_s1, rtol=1e-4, atol=1e-2), (s1, ref_s1)
    assert jnp.allclose(s2, ref_s2, rtol=1e-4, atol=1e-2), (s2, ref_s2)

    # Full forward pass (host-side int()/log glue, as in the PyTorch module).
    loss = edgeV_loss(X1, X2)
    ref_loss = -math.log(int(ref_s1) / int(ref_s2))
    assert abs(loss - ref_loss) < 1e-3, (loss, ref_loss)

    print("KERNEL_OK")
</pallas_src>

<mosaic_0001>
module attributes {stable_mosaic.version = 11 : i64} {
  func.func @_edge_sum_kernel(%arg0: i32, %arg1: i32, %arg2: memref<8x256xf32, #tpu.memory_space<vmem>>, %arg3: memref<8x256xf32, #tpu.memory_space<vmem>>, %arg4: memref<8x240xf32, #tpu.memory_space<vmem>>, %arg5: memref<8x240xf32, #tpu.memory_space<vmem>>) attributes {dimension_semantics = [#tpu.dimension_semantics<parallel>, #tpu.dimension_semantics<arbitrary>], iteration_bounds = array<i64: 2, 1>, scalar_prefetch = 0 : i64, scratch_operands = 0 : i64, tpu.core_type = #tpu.core_type<tc>, window_params = [{transform_indices = @transform_0, window_bounds = array<i64: 8, 256>}, {transform_indices = @transform_1, window_bounds = array<i64: 8, 256>}, {transform_indices = @transform_2, window_bounds = array<i64: 8, 240>}, {transform_indices = @transform_3, window_bounds = array<i64: 8, 240>}]} {
    %c0_i32 = arith.constant 0 : i32
    %0 = arith.cmpi eq, %arg1, %c0_i32 : i32
    %1 = arith.extui %0 : i1 to i32
    %c0_i32_0 = arith.constant 0 : i32
    %2 = arith.cmpi ne, %1, %c0_i32_0 : i32
    scf.if %2 {
      %cst_13 = arith.constant 0.000000e+00 : f32
      %23 = vector.broadcast %cst_13 : f32 to vector<8x240xf32>
      %c0_14 = arith.constant 0 : index
      %c0_15 = arith.constant 0 : index
      %24 = vector.load %arg4[%c0_14, %c0_15] : memref<8x240xf32, #tpu.memory_space<vmem>>, vector<8x240xf32>
      tpu.vector_store %arg4[%c0_14, %c0_15], %23 {strides = array<i32>} : memref<8x240xf32, #tpu.memory_space<vmem>>, vector<8x240xf32>,
      %cst_16 = arith.constant 0.000000e+00 : f32
      %25 = vector.broadcast %cst_16 : f32 to vector<8x240xf32>
      %c0_17 = arith.constant 0 : index
      %c0_18 = arith.constant 0 : index
      %26 = vector.load %arg5[%c0_17, %c0_18] : memref<8x240xf32, #tpu.memory_space<vmem>>, vector<8x240xf32>
      tpu.vector_store %arg5[%c0_17, %c0_18], %25 {strides = array<i32>} : memref<8x240xf32, #tpu.memory_space<vmem>>, vector<8x240xf32>,
    } else {
    }
    %c0 = arith.constant 0 : index
    %c0_1 = arith.constant 0 : index
    %3 = vector.load %arg2[%c0, %c0_1] : memref<8x256xf32, #tpu.memory_space<vmem>>, vector<8x256xf32>
    %c0_2 = arith.constant 0 : index
    %c0_3 = arith.constant 0 : index
    %4 = vector.load %arg3[%c0_2, %c0_3] : memref<8x256xf32, #tpu.memory_space<vmem>>, vector<8x256xf32>
    %5 = vector.extract_strided_slice %3 {offsets = [0, 0], sizes = [8, 240], strides = [1, 1]} : vector<8x256xf32> to vector<8x240xf32>
    %6 = vector.extract_strided_slice %3 {offsets = [0, 16], sizes = [8, 240], strides = [1, 1]} : vector<8x256xf32> to vector<8x240xf32>
    %7 = arith.subf %5, %6 : vector<8x240xf32>
    %8 = math.absf %7 : vector<8x240xf32>
    %9 = vector.extract_strided_slice %4 {offsets = [0, 0], sizes = [8, 240], strides = [1, 1]} : vector<8x256xf32> to vector<8x240xf32>
    %10 = vector.extract_strided_slice %4 {offsets = [0, 16], sizes = [8, 240], strides = [1, 1]} : vector<8x256xf32> to vector<8x240xf32>
    %11 = arith.subf %9, %10 : vector<8x240xf32>
    %12 = math.absf %11 : vector<8x240xf32>
    %c0_4 = arith.constant 0 : index
    %c0_5 = arith.constant 0 : index
    %13 = vector.load %arg4[%c0_4, %c0_5] : memref<8x240xf32, #tpu.memory_space<vmem>>, vector<8x240xf32>
    %14 = vector.shape_cast %8 : vector<8x240xf32> to vector<1x8x240xf32>
    %cst = arith.constant dense<0.000000e+00> : vector<8x240xf32>
    %15 = vector.multi_reduction <add>, %14, %cst [0] : vector<1x8x240xf32> to vector<8x240xf32>
    %16 = arith.addf %13, %15 : vector<8x240xf32>
    %c0_6 = arith.constant 0 : index
    %c0_7 = arith.constant 0 : index
    %17 = vector.load %arg4[%c0_6, %c0_7] : memref<8x240xf32, #tpu.memory_space<vmem>>, vector<8x240xf32>
    tpu.vector_store %arg4[%c0_6, %c0_7], %16 {strides = array<i32>} : memref<8x240xf32, #tpu.memory_space<vmem>>, vector<8x240xf32>,
    %c0_8 = arith.constant 0 : index
    %c0_9 = arith.constant 0 : index
    %18 = vector.load %arg5[%c0_8, %c0_9] : memref<8x240xf32, #tpu.memory_space<vmem>>, vector<8x240xf32>
    %19 = vector.shape_cast %12 : vector<8x240xf32> to vector<1x8x240xf32>
    %cst_10 = arith.constant dense<0.000000e+00> : vector<8x240xf32>
    %20 = vector.multi_reduction <add>, %19, %cst_10 [0] : vector<1x8x240xf32> to vector<8x240xf32>
    %21 = arith.addf %18, %20 : vector<8x240xf32>
    %c0_11 = arith.constant 0 : index
    %c0_12 = arith.constant 0 : index
    %22 = vector.load %arg5[%c0_11, %c0_12] : memref<8x240xf32, #tpu.memory_space<vmem>>, vector<8x240xf32>
    tpu.vector_store %arg5[%c0_11, %c0_12], %21 {strides = array<i32>} : memref<8x240xf32, #tpu.memory_space<vmem>>, vector<8x240xf32>,
    return
  }
  func.func @transform_0(%arg0: i32, %arg1: i32) -> (i32, i32) {
    %c1_i32 = arith.constant 1 : i32
    %0 = arith.muli %arg0, %c1_i32 : i32
    %1 = arith.addi %0, %arg1 : i32
    %c0_i32 = arith.constant 0 : i32
    %c0_i32_0 = arith.constant 0 : i32
    return %1, %c0_i32 : i32, i32
  }
  func.func @transform_1(%arg0: i32, %arg1: i32) -> (i32, i32) {
    %c1_i32 = arith.constant 1 : i32
    %0 = arith.muli %arg0, %c1_i32 : i32
    %1 = arith.addi %0, %arg1 : i32
    %c0_i32 = arith.constant 0 : i32
    %c0_i32_0 = arith.constant 0 : i32
    return %1, %c0_i32 : i32, i32
  }
  func.func @transform_2(%arg0: i32, %arg1: i32) -> (i32, i32) {
    %c0_i32 = arith.constant 0 : i32
    %c0_i32_0 = arith.constant 0 : i32
    return %arg0, %c0_i32 : i32, i32
  }
  func.func @transform_3(%arg0: i32, %arg1: i32) -> (i32, i32) {
    %c0_i32 = arith.constant 0 : i32
    %c0_i32_0 = arith.constant 0 : i32
    return %arg0, %c0_i32 : i32, i32
  }
}

</mosaic_0001>

<llo_original>
// kernel: tpu_custom_call.1
$region0: #{tpu_custom_call.1}
  #allocation0 [shape = 'u32[]', space=smem, size = 0x4, offset = 0x4, fixed_abs, tag = 'smem constant byte address 0x4 - core index']
  #allocation1 [shape = 'u32[144,128]{1,0:T(1,128)}', space=vmem, size = 0x12000, scoped, tag = 'internal scratch']
  %s0 = inlined_call_operand.hbm [shape: f32[16,256], index: 0, kind: input, shape index: {}]
  %s1 = inlined_call_operand.hbm [shape: f32[16,256], index: 1, kind: input, shape index: {}]
  %s2 = inlined_call_operand.hbm [shape: f32[16,240], index: 2, kind: output, shape index: {0}]
  %s3 = inlined_call_operand.hbm [shape: f32[16,240], index: 3, kind: output, shape index: {1}]
  %4 = xla_tuple %s2, %s3
  %s5 = sld [smem:[#allocation0]]
  $region61: #{tpu_custom_call.1} parent=0
    _
  %s7 = ssub.s32 1, %s5
  %s8 = scalar_select 0, %s7, %s5
  $region1: #{tpu_custom_call.1} parent=0
    #allocation2 [shape = 'u8[16384]{0}', space=vmem, size = 0x4000, scoped, tag = 'input window, operand 0']
    #allocation3 [shape = 's32[2]{0}', space=sflag, size = 0x8, scoped, tag = 'scoped memory for tpu_custom_call.1']
    #allocation4 [shape = 's32[2]{0}', space=sflag, size = 0x8, scoped, tag = 'scoped memory for tpu_custom_call.1']
    #allocation5 [shape = 'u8[16384]{0}', space=vmem, size = 0x4000, scoped, tag = 'input window, operand 1']
    #allocation6 [shape = 's32[2]{0}', space=sflag, size = 0x8, scoped, tag = 'scoped memory for tpu_custom_call.1']
    #allocation7 [shape = 'u8[16384]{0}', space=vmem, size = 0x4000, scoped, tag = 'output window, operand 0']
    #allocation8 [shape = 'u8[16384]{0}', space=vmem, size = 0x4000, scoped, tag = 'output window, operand 1']
    #allocation9 [shape = 's32[2]{0}', space=sflag, size = 0x8, scoped, tag = 'scoped memory for tpu_custom_call.1']
    %9 = vsyncpa [#allocation3], 0
    %s10 = scalar_lea.sflag [#allocation3], 1
    %11 = vsyncpa %s10, 0
    %12 = vsyncpa [#allocation6], 0
    %s13 = scalar_lea.sflag [#allocation6], 1
    %14 = vsyncpa %s13, 0
    %15 = vsyncpa [#allocation4], 0
    %s16 = scalar_lea.sflag [#allocation4], 1
    %17 = vsyncpa %s16, 0
    %18 = vsyncpa [#allocation9], 0
    %s19 = scalar_lea.sflag [#allocation9], 1
    %20 = vsyncpa %s19, 0
    loop: start=0, step=1, limit=4
    $region2: #{tpu_custom_call.1} parent=1 // loop_pre_header
      _
    $region3: #{tpu_custom_call.1} parent=1 // loop_header
      %s22 = sphi 0, %s26
      %p23 = scmp.ge.s32.totalorder %s22, 4
      %s29 = sphi 0, %s41
      %s30 = sphi 0, %s37
      %s31 = sphi 0, %s29
      %s32 = sphi 0, %s30
      %s33 = sphi 0, %s31
      %s34 = sphi 0, %s32
      %s46 = sphi 0, %s48
      %s49 = sphi 0, %s46
      %s50 = sphi 0, %s49
      %s66 = sphi 0, %s50
      %s74 = sphi 0, %s76
      %s77 = sphi 0, %s74
      %s78 = sphi 0, %s77
      %s94 = sphi 0, %s78
      %s100 = sphi 0, %s102
      %s103 = sphi 0, %s100
      %s104 = sphi 0, %s103
      %s120 = sphi 0, %s104
      %s126 = sphi 0, %s128
      %s129 = sphi 0, %s126
      %s130 = sphi 0, %s129
      %s146 = sphi 0, %s130
    $region4: #{tpu_custom_call.1} parent=1 // loop_header_branch
      %25 = sbr.rel (%p23) target = $region8
    $region5: #{tpu_custom_call.1} parent=1 // loop_body
      %s27 = ssub.s32 %s22, 1
      %s28 = ssub.s32 %s22, 2
      %s35 = sadd.s32 1, %s30
      %p36 = scmp.ge.s32.totalorder %s35, 1
      %s37 = scalar_select %p36, 0, %s35
      %s38 = sadd.s32 1, %s29
      %s39 = scalar_select %p36, %s38, %s29
      %p40 = scmp.ge.s32.totalorder %s39, 2
      %s41 = scalar_select %p40, 0, %s39
      %s42 = sadd.s32 %s29, %s30
      %s43 = sadd.s32 %s41, %s37
      %s44 = ssub.s32 %s42, %s43
      %p45 = scmp.eq.s32.totalorder %s44, 0
      %s47 = sadd.s32 %s46, 1
      %s48 = scalar_select %p45, %s46, %s47
      %p51 = pneg %p45
      %p52 = scmp.eq.s32.totalorder %s22, 1
      %p53 = por %p51, %p52
      %p54 = scmp.ne.s32.totalorder %s46, %s49
      %p55 = scmp.eq.s32.totalorder %s22, 0
      %p56 = por %p54, %p55
      %p57 = scmp.ne.s32.totalorder %s46, %s49
      %p58 = scmp.eq.s32.totalorder %s27, 1
      %p59 = por %p57, %p58
      %p60 = scmp.ne.s32.totalorder %s49, %s50
      %p61 = scmp.eq.s32.totalorder %s27, 0
      %p62 = por %p60, %p61
      %p63 = scmp.ne.s32.totalorder %s49, %s50
      %p64 = scmp.eq.s32.totalorder %s28, 1
      %p65 = por %p63, %p64
      %p67 = scmp.ne.s32.totalorder %s50, %s66
      %p68 = scmp.eq.s32.totalorder %s28, 0
      %p69 = por %p67, %p68
      %s70 = sadd.s32 %s29, %s30
      %s71 = sadd.s32 %s41, %s37
      %s72 = ssub.s32 %s70, %s71
      %p73 = scmp.eq.s32.totalorder %s72, 0
      %s75 = sadd.s32 %s74, 1
      %s76 = scalar_select %p73, %s74, %s75
      %p79 = pneg %p73
      %p80 = scmp.eq.s32.totalorder %s22, 1
      %p81 = por %p79, %p80
      %p82 = scmp.ne.s32.totalorder %s74, %s77
      %p83 = scmp.eq.s32.totalorder %s22, 0
      %p84 = por %p82, %p83
      %p85 = scmp.ne.s32.totalorder %s74, %s77
      %p86 = scmp.eq.s32.totalorder %s27, 1
      %p87 = por %p85, %p86
      %p88 = scmp.ne.s32.totalorder %s77, %s78
      %p89 = scmp.eq.s32.totalorder %s27, 0
      %p90 = por %p88, %p89
      %p91 = scmp.ne.s32.totalorder %s77, %s78
      %p92 = scmp.eq.s32.totalorder %s28, 1
      %p93 = por %p91, %p92
      %p95 = scmp.ne.s32.totalorder %s78, %s94
      %p96 = scmp.eq.s32.totalorder %s28, 0
      %p97 = por %p95, %p96
      %s98 = ssub.s32 %s29, %s41
      %p99 = scmp.eq.s32.totalorder %s98, 0
      %s101 = sadd.s32 %s100, 1
      %s102 = scalar_select %p99, %s100, %s101
      %p105 = pneg %p99
      %p106 = scmp.eq.s32.totalorder %s22, 1
      %p107 = por %p105, %p106
      %p108 = scmp.ne.s32.totalorder %s100, %s103
      %p109 = scmp.eq.s32.totalorder %s22, 0
      %p110 = por %p108, %p109
      %p111 = scmp.ne.s32.totalorder %s100, %s103
      %p112 = scmp.eq.s32.totalorder %s27, 1
      %p113 = por %p111, %p112
      %p114 = scmp.ne.s32.totalorder %s103, %s104
      %p115 = scmp.eq.s32.totalorder %s27, 0
      %p116 = por %p114, %p115
      %p117 = scmp.ne.s32.totalorder %s103, %s104
      %p118 = scmp.eq.s32.totalorder %s28, 1
      %p119 = por %p117, %p118
      %p121 = scmp.ne.s32.totalorder %s104, %s120
      %p122 = scmp.eq.s32.totalorder %s28, 0
      %p123 = por %p121, %p122
      %s124 = ssub.s32 %s29, %s41
      %p125 = scmp.eq.s32.totalorder %s124, 0
      %s127 = sadd.s32 %s126, 1
      %s128 = scalar_select %p125, %s126, %s127
      %p131 = pneg %p125
      %p132 = scmp.eq.s32.totalorder %s22, 1
      %p133 = por %p131, %p132
      %p134 = scmp.ne.s32.totalorder %s126, %s129
      %p135 = scmp.eq.s32.totalorder %s22, 0
      %p136 = por %p134, %p135
      %p137 = scmp.ne.s32.totalorder %s126, %s129
      %p138 = scmp.eq.s32.totalorder %s27, 1
      %p139 = por %p137, %p138
      %p140 = scmp.ne.s32.totalorder %s129, %s130
      %p141 = scmp.eq.s32.totalorder %s27, 0
      %p142 = por %p140, %p141
      %p143 = scmp.ne.s32.totalorder %s129, %s130
      %p144 = scmp.eq.s32.totalorder %s28, 1
      %p145 = por %p143, %p144
      %p147 = scmp.ne.s32.totalorder %s130, %s146
      %p148 = scmp.eq.s32.totalorder %s28, 0
      %p149 = por %p147, %p148
      %p150 = scmp.le.s32.totalorder 1, %s22
      %p151 = scmp.lt.s32.totalorder %s22, 3
      %p152 = pnand %p150, %p151
      %p153 = pneg %p152
      // Predicated region
      $region9: #{tpu_custom_call.1} parent=5 // pred_check
        _
      $region10: #{tpu_custom_call.1} parent=5 // pred_check_branch
        %155 = sbr.rel (%p152) target = $region12
      $region11: #{tpu_custom_call.1} parent=5 // pred_region
        %s156 = ssub.s32 %s22, 1
      $region12: #{tpu_custom_call.1} parent=5 // pred_fallthru
        _
      %p157 = scmp.lt.s32.totalorder %s22, 2
      // Predicated region
      $region13: #{tpu_custom_call.1} parent=5 // pred_check
        %p158 = pneg %p157
      $region14: #{tpu_custom_call.1} parent=5 // pred_check_branch
        %160 = sbr.rel (%p158) target = $region16
      $region15: #{tpu_custom_call.1} parent=5 // pred_region
        // Predicated region
        $region17: #{tpu_custom_call.1} parent=15 // pred_check
          %p161 = pneg %p56
        $region18: #{tpu_custom_call.1} parent=15 // pred_check_branch
          %163 = sbr.rel (%p161) target = $region20
        $region19: #{tpu_custom_call.1} parent=15 // pred_region
          %s164 = sand.u32 %s46, 1
          %s165 = scalar_lea.sflag [#allocation3], %s164
          %s166 = sand.u32 %s46, 1
          %s167 = smul.addr %s166, 16
          %s168 = scalar_lea.vmem [#allocation2], %s167
          %s169 = sadd.s32 %s29, %s30
          %s171 = ssub.s32 256, 256
          %172 = vsyncadd %s165, %s171
          %s173 = smul.addr %s169, 2
          %s174 = smul.addr %s173, 128
          %s175 = scalar_lea.hbm %s0, %s174
          %s177 = sshll.u32 %s168, 4
          %s178 = int_to_ptr.vmem [resolvable:$true] %s177
          %180 = dma.hbm_to_vmem [thread:$0]  %s175, 256, %s178, %s165
        $region20: #{tpu_custom_call.1} parent=15 // pred_fallthru
          _
        // Predicated region
        $region21: #{tpu_custom_call.1} parent=15 // pred_check
          %p181 = pneg %p84
        $region22: #{tpu_custom_call.1} parent=15 // pred_check_branch
          %183 = sbr.rel (%p181) target = $region24
        $region23: #{tpu_custom_call.1} parent=15 // pred_region
          %s184 = sand.u32 %s74, 1
          %s185 = scalar_lea.sflag [#allocation6], %s184
          %s186 = sand.u32 %s74, 1
          %s187 = smul.addr %s186, 16
          %s188 = scalar_lea.vmem [#allocation5], %s187
          %s189 = sadd.s32 %s29, %s30
          %s191 = ssub.s32 256, 256
          %192 = vsyncadd %s185, %s191
          %s193 = smul.addr %s189, 2
          %s194 = smul.addr %s193, 128
          %s195 = scalar_lea.hbm %s1, %s194
          %s197 = sshll.u32 %s188, 4
          %s198 = int_to_ptr.vmem [resolvable:$true] %s197
          %200 = dma.hbm_to_vmem [thread:$0]  %s195, 256, %s198, %s185
        $region24: #{tpu_custom_call.1} parent=15 // pred_fallthru
          _
      $region16: #{tpu_custom_call.1} parent=5 // pred_fallthru
        _
      %p201 = scmp.le.s32.totalorder 1, %s22
      %p202 = scmp.lt.s32.totalorder %s22, 3
      %p203 = pnand %p201, %p202
      %p204 = pneg %p203
      // Predicated region
      $region25: #{tpu_custom_call.1} parent=5 // pred_check
        _
      $region26: #{tpu_custom_call.1} parent=5 // pred_check_branch
        %206 = sbr.rel (%p203) target = $region28
      $region27: #{tpu_custom_call.1} parent=5 // pred_region
        %s207 = ssub.s32 %s22, 1
        %s208 = sand.u32 %s49, 1
        %s209 = scalar_lea.sflag [#allocation3], %s208
        %s210 = sand.u32 %s49, 1
        %s211 = smul.addr %s210, 16
        %s212 = scalar_lea.vmem [#allocation2], %s211
        // Predicated region
        $region29: #{tpu_custom_call.1} parent=27 // pred_check
          %p213 = pneg %p62
        $region30: #{tpu_custom_call.1} parent=27 // pred_check_branch
          %215 = sbr.rel (%p213) target = $region32
        $region31: #{tpu_custom_call.1} parent=27 // pred_region
          %216 = dma.done %s209, 256
        $region32: #{tpu_custom_call.1} parent=27 // pred_fallthru
          _
        %s217 = sand.u32 %s77, 1
        %s218 = scalar_lea.sflag [#allocation6], %s217
        %s219 = sand.u32 %s77, 1
        %s220 = smul.addr %s219, 16
        %s221 = scalar_lea.vmem [#allocation5], %s220
        // Predicated region
        $region33: #{tpu_custom_call.1} parent=27 // pred_check
          %p222 = pneg %p90
        $region34: #{tpu_custom_call.1} parent=27 // pred_check_branch
          %224 = sbr.rel (%p222) target = $region36
        $region35: #{tpu_custom_call.1} parent=27 // pred_region
          %225 = dma.done %s218, 256
        $region36: #{tpu_custom_call.1} parent=27 // pred_fallthru
          _
        %s226 = sand.u32 %s49, 1
        %s227 = scalar_lea.sflag [#allocation3], %s226
        %s228 = sand.u32 %s49, 1
        %s229 = smul.addr %s228, 16
        %s230 = scalar_lea.vmem [#allocation2], %s229
        %p231 = pneg %p62
        %p232 = pneg %p59
        %s233 = sand.u32 %s77, 1
        %s234 = scalar_lea.sflag [#allocation6], %s233
        %s235 = sand.u32 %s77, 1
        %s236 = smul.addr %s235, 16
        %s237 = scalar_lea.vmem [#allocation5], %s236
        %p238 = pneg %p90
        %p239 = pneg %p87
        %p240 = pneg %p116
        %p241 = pneg %p113
        %s242 = sand.u32 %s103, 1
        %s243 = scalar_lea.sflag [#allocation4], %s242
        %s244 = sand.u32 %s103, 1
        %s245 = smul.addr %s244, 16
        %s246 = scalar_lea.vmem [#allocation7], %s245
        %p247 = pneg %p142
        %p248 = pneg %p139
        %s249 = sand.u32 %s129, 1
        %s250 = scalar_lea.sflag [#allocation9], %s249
        %s251 = sand.u32 %s129, 1
        %s252 = smul.addr %s251, 16
        %s253 = scalar_lea.vmem [#allocation8], %s252
        %s254 = sadd.s32 %s31, %s32
        %s255 = sadd.s32 %s31, %s32
        %p256 = scmp.eq.s32.totalorder %s32, 0
        // Predicated region
        $region37: #{tpu_custom_call.1} parent=27 // pred_check
          %p257 = pneg %p256
        $region38: #{tpu_custom_call.1} parent=27 // pred_check_branch
          %259 = sbr.rel (%p257) target = $region40
        $region39: #{tpu_custom_call.1} parent=27 // pred_region
          %260 = vst [vmem:[%s246] sm:$0xff] 0.0
          %vm261 = vcmask 916480
          %262 = vst.msk [vmem:[%s246 + $0x8] sm:$0xff] %vm261, 0.0
          %263 = vst [vmem:[%s253] sm:$0xff] 0.0
          %264 = vst.msk [vmem:[%s253 + $0x8] sm:$0xff] %vm261, 0.0
        $region40: #{tpu_custom_call.1} parent=27 // pred_fallthru
          _
        %v265 = vld [vmem:[%s212] sm:$0xff]
        %v266 = vld [vmem:[%s212 + $0x8] sm:$0xff]
        %v267 = vld [vmem:[%s221] sm:$0xff]
        %v268 = vld [vmem:[%s221 + $0x8] sm:$0xff]
        %271 = vrot.lane.b32.xlu0 %v265, 112
        %v272 = vpop.permute.xlu0 %271
        %273 = vrot.lane.b32.xlu0 %v266, 112
        %v274 = vpop.permute.xlu0 %273
        %vm275 = vcmask 916480
        %v276 = vsel %vm275, %v272, %v274
        %v279 = vsub.f32 %v265, %v276
        %v280 = vsub.f32 %v266, %v274
        %v281 = vand.u32 2147483647, %v279
        %v282 = vand.u32 2147483647, %v280
        %285 = vrot.lane.b32.xlu0 %v267, 112
        %v286 = vpop.permute.xlu0 %285
        %287 = vrot.lane.b32.xlu0 %v268, 112
        %v288 = vpop.permute.xlu0 %287
        %v289 = vsel %vm275, %v286, %v288
        %v292 = vsub.f32 %v267, %v289
        %v293 = vsub.f32 %v268, %v288
        %v294 = vand.u32 2147483647, %v292
        %v295 = vand.u32 2147483647, %v293
        %v296 = vld [vmem:[%s246] sm:$0xff]
        %v297 = vld [vmem:[%s246 + $0x8] sm:$0xff]
        %v298 = vadd.f32 %v281, 0.0
        %v299 = vadd.f32 %v282, 0.0
        %v300 = vadd.f32 %v296, %v298
        %v301 = vadd.f32 %v297, %v299
        %302 = vst [vmem:[%s246] sm:$0xff] %v300
        %303 = vst.msk [vmem:[%s246 + $0x8] sm:$0xff] %vm275, %v301
        %v304 = vld [vmem:[%s253] sm:$0xff]
        %v305 = vld [vmem:[%s253 + $0x8] sm:$0xff]
        %v306 = vadd.f32 %v294, 0.0
        %v307 = vadd.f32 %v295, 0.0
        %v308 = vadd.f32 %v304, %v306
        %v309 = vadd.f32 %v305, %v307
        %310 = vst [vmem:[%s253] sm:$0xff] %v308
        %311 = vst.msk [vmem:[%s253 + $0x8] sm:$0xff] %vm275, %v309
        %s312 = sand.u32 %s103, 1
        %s313 = scalar_lea.sflag [#allocation4], %s312
        %s314 = sand.u32 %s103, 1
        %s315 = smul.addr %s314, 16
        %s316 = scalar_lea.vmem [#allocation7], %s315
        %s317 = sand.u32 %s129, 1
        %s318 = scalar_lea.sflag [#allocation9], %s317
        %s319 = sand.u32 %s129, 1
        %s320 = smul.addr %s319, 16
        %s321 = scalar_lea.vmem [#allocation8], %s320
        // Predicated region
        $region41: #{tpu_custom_call.1} parent=27 // pred_check
          %p322 = pneg %p113
        $region42: #{tpu_custom_call.1} parent=27 // pred_check_branch
          %324 = sbr.rel (%p322) target = $region44
        $region43: #{tpu_custom_call.1} parent=27 // pred_region
          %s326 = ssub.s32 256, 256
          %327 = vsyncadd %s313, %s326
          %s328 = smul.addr %s31, 2
          %s329 = smul.addr %s328, 128
          %s330 = scalar_lea.hbm %s2, %s329
          %s332 = sshll.u32 %s316, 4
          %s333 = int_to_ptr.vmem [resolvable:$true] %s332
          %335 = dma.vmem_to_hbm [thread:$0]  %s333, 256, %s330, %s313
        $region44: #{tpu_custom_call.1} parent=27 // pred_fallthru
          _
        // Predicated region
        $region45: #{tpu_custom_call.1} parent=27 // pred_check
          %p336 = pneg %p139
        $region46: #{tpu_custom_call.1} parent=27 // pred_check_branch
          %338 = sbr.rel (%p336) target = $region48
        $region47: #{tpu_custom_call.1} parent=27 // pred_region
          %s340 = ssub.s32 256, 256
          %341 = vsyncadd %s318, %s340
          %s342 = smul.addr %s31, 2
          %s343 = smul.addr %s342, 128
          %s344 = scalar_lea.hbm %s3, %s343
          %s346 = sshll.u32 %s321, 4
          %s347 = int_to_ptr.vmem [resolvable:$true] %s346
          %349 = dma.vmem_to_hbm [thread:$0]  %s347, 256, %s344, %s318
        $region48: #{tpu_custom_call.1} parent=27 // pred_fallthru
          _
      $region28: #{tpu_custom_call.1} parent=5 // pred_fallthru
        _
      %p350 = scmp.le.s32.totalorder 2, %s22
      // Predicated region
      $region49: #{tpu_custom_call.1} parent=5 // pred_check
        %p351 = pneg %p350
      $region50: #{tpu_custom_call.1} parent=5 // pred_check_branch
        %353 = sbr.rel (%p351) target = $region52
      $region51: #{tpu_custom_call.1} parent=5 // pred_region
        %s354 = ssub.s32 %s22, 2
        // Predicated region
        $region53: #{tpu_custom_call.1} parent=51 // pred_check
          %p355 = pneg %p119
        $region54: #{tpu_custom_call.1} parent=51 // pred_check_branch
          %357 = sbr.rel (%p355) target = $region56
        $region55: #{tpu_custom_call.1} parent=51 // pred_region
          %s358 = sand.u32 %s104, 1
          %s359 = scalar_lea.sflag [#allocation4], %s358
          %s360 = sand.u32 %s104, 1
          %s361 = smul.addr %s360, 16
          %s362 = scalar_lea.vmem [#allocation7], %s361
          %363 = dma.done %s359, 256
        $region56: #{tpu_custom_call.1} parent=51 // pred_fallthru
          _
        // Predicated region
        $region57: #{tpu_custom_call.1} parent=51 // pred_check
          %p364 = pneg %p145
        $region58: #{tpu_custom_call.1} parent=51 // pred_check_branch
          %366 = sbr.rel (%p364) target = $region60
        $region59: #{tpu_custom_call.1} parent=51 // pred_region
          %s367 = sand.u32 %s130, 1
          %s368 = scalar_lea.sflag [#allocation9], %s367
          %s369 = sand.u32 %s130, 1
          %s370 = smul.addr %s369, 16
          %s371 = scalar_lea.vmem [#allocation8], %s370
          %372 = dma.done %s368, 256
        $region60: #{tpu_custom_call.1} parent=51 // pred_fallthru
          _
      $region52: #{tpu_custom_call.1} parent=5 // pred_fallthru
        _
    $region6: #{tpu_custom_call.1} parent=1 // loop_footer
      %s26 = sadd.s32 1, %s22
    $region7: #{tpu_custom_call.1} parent=1 // loop_footer_branch
      %21 = sbr.rel target = $region3
    $region8: #{tpu_custom_call.1} parent=1 // loop_exit
      _
    %373 = vsyncpa [#allocation3], 1
    %s374 = scalar_lea.sflag [#allocation3], 1
    %375 = vsyncpa %s374, 1
    %376 = vsyncpa [#allocation6], 1
    %s377 = scalar_lea.sflag [#allocation6], 1
    %378 = vsyncpa %s377, 1
    %379 = vsyncpa [#allocation4], 1
    %s380 = scalar_lea.sflag [#allocation4], 1
    %381 = vsyncpa %s380, 1
    %382 = vsyncpa [#allocation9], 1
    %s383 = scalar_lea.sflag [#allocation9], 1
    %384 = vsyncpa %s383, 1

</llo_original>
